<compile_context>
chip_gen: v7x
topology: tpu7x:2x2x1
jax: 0.10.0
libtpu: 0.0.40
codegen_flags: <defaults>
</compile_context>

<pallas_src>
import math
import functools

import jax
import jax.numpy as jnp
from jax.experimental import pallas as pl
from jax.experimental.pallas import tpu as pltpu


def _pick_tile(dim, preferred, multiple):
    """Largest tile <= preferred that is a multiple of `multiple` and divides `dim`.

    Falls back to the full dimension (always a legal block shape)."""
    if dim <= preferred:
        return dim
    t = (preferred // multiple) * multiple
    while t >= multiple:
        if dim % t == 0:
            return t
        t -= multiple
    return dim


def _arcface_kernel(x_ref, w_ref, xinv_ref, winv_ref, *rest,
                    s, cos_m, sin_m, tile_c, use_label):
    if use_label:
        label_ref, o_ref = rest
    else:
        (o_ref,) = rest

    # Raw (un-normalized) x @ W^T on the MXU: bf16 inputs, f32 accumulation.
    raw = jax.lax.dot_general(
        x_ref[...], w_ref[...],
        dimension_numbers=(((1,), (1,)), ((), ())),
        preferred_element_type=jnp.float32,
    )  # (TB, TC) f32

    # Rank-1 post-matmul normalization:  cosine = raw / (||x_b|| * ||w_c||).
    cosine = raw * xinv_ref[...] * winv_ref[...]   # (TB,1) and (1,TC) broadcasts

    if use_label:
        jc = pl.program_id(0)                              # class-tile index
        label_local = label_ref[...] - jc * tile_c         # (TB, 1) i32
        col_ids = jax.lax.broadcasted_iota(jnp.int32, cosine.shape, 1)
        one_hot = col_ids == label_local                   # (TB, TC) bool

        # Gather cosine at the label column (0.0 if the label is not in this
        # class tile) so sqrt / phi run on B elements, not B*C.
        cos_lbl = jnp.sum(jnp.where(one_hot, cosine, 0.0), axis=-1, keepdims=True)
        sin_lbl = jnp.sqrt(jnp.clip(1.0 - cos_lbl * cos_lbl, 1e-9, 1.0))
        phi_lbl = cos_lbl * cos_m - sin_lbl * sin_m
        delta = phi_lbl - cos_lbl                          # (TB, 1)
        out = cosine + jnp.where(one_hot, delta, 0.0)
    else:
        out = cosine

    o_ref[...] = out * jnp.float32(s)


def arcface_forward(x, weight, label=None, *, s=64.0, m=0.5,
                    tile_b=128, tile_c=512):
    """ArcFace forward.  x: (B, D), weight: (C, D), label: (B,) int or None.

    Returns (B, C) float32 logits, matching the PyTorch module's forward()."""
    B, D = x.shape
    C, D2 = weight.shape
    assert D == D2

    tb = _pick_tile(B, tile_b, 8)
    tc = _pick_tile(C, tile_c, 128)
    grid = (C // tc, B // tb)   # class tiles OUTER -> W tile reused across batch tiles

    # Tiny rank-1 scale vectors, computed once: 1/max(||row||, eps) via rsqrt.
    eps = 1e-12
    x32 = x.astype(jnp.float32)
    w32 = weight.astype(jnp.float32)
    x_inv = jax.lax.rsqrt(
        jnp.maximum(jnp.sum(x32 * x32, axis=1, keepdims=True), eps * eps))          # (B, 1)
    w_inv = jax.lax.rsqrt(
        jnp.maximum(jnp.sum(w32 * w32, axis=1), eps * eps))[None, :]                 # (1, C)

    # bf16 matmul operands (cast once here so the kernel streams half the bytes).
    x_bf = x.astype(jnp.bfloat16)
    w_bf = weight.astype(jnp.bfloat16)

    use_label = label is not None

    in_specs = [
        pl.BlockSpec((tb, D), lambda jc, ib: (ib, 0)),   # x tile
        pl.BlockSpec((tc, D), lambda jc, ib: (jc, 0)),   # W tile (outer axis -> reused)
        pl.BlockSpec((tb, 1), lambda jc, ib: (ib, 0)),   # 1/||x||
        pl.BlockSpec((1, tc), lambda jc, ib: (0, jc)),   # 1/||w||
    ]
    operands = [x_bf, w_bf, x_inv, w_inv]
    if use_label:
        in_specs.append(pl.BlockSpec((tb, 1), lambda jc, ib: (ib, 0)))
        operands.append(label.astype(jnp.int32).reshape(B, 1))

    kernel = functools.partial(
        _arcface_kernel,
        s=float(s), cos_m=math.cos(m), sin_m=math.sin(m),
        tile_c=tc, use_label=use_label,
    )

    # TODO(synk): for very large D (> ~2048) add a K grid axis over D with a f32
    # VMEM accumulator (pl.when init/finalize) instead of full-D blocks.
    return pl.pallas_call(
        kernel,
        out_shape=jax.ShapeDtypeStruct((B, C), jnp.float32),
        grid=grid,
        in_specs=in_specs,
        out_specs=pl.BlockSpec((tb, tc), lambda jc, ib: (ib, jc)),
        compiler_params=pltpu.CompilerParams(
            dimension_semantics=("parallel", "parallel"),
        ),
    )(*operands)


def _xavier_uniform(key, out_dim, in_dim):
    # nn.init.xavier_uniform_ on a (out, in) weight: U(-a, a), a = sqrt(6/(fan_in+fan_out))
    bound = math.sqrt(6.0 / (in_dim + out_dim))
    return jax.random.uniform(key, (out_dim, in_dim), jnp.float32, -bound, bound)


if __name__ == "__main__":
    key = jax.random.PRNGKey(0)
    k_x, k_w, k_l = jax.random.split(key, 3)

    B, D, C = 32, 64, 256          # batch, feature dim, number of classes
    s_, m_ = 64.0, 0.5

    x = jax.random.normal(k_x, (B, D), jnp.float32)
    weight = _xavier_uniform(k_w, C, D)
    label = jax.random.randint(k_l, (B,), 0, C, jnp.int32)

    # grid = (C/128, B/16) = (2, 2) -> exercises both tiled axes.
    out = jax.block_until_ready(
        arcface_forward(x, weight, label, s=s_, m=m_, tile_b=16, tile_c=128))
    assert out.shape == (B, C) and out.dtype == jnp.float32

    # Reference matching the kernel's numerics (bf16 MXU operands, f32 rank-1
    # normalization applied after the matmul).
    def ref_matched(x, w, label, s, m):
        raw = jnp.dot(x.astype(jnp.bfloat16), w.astype(jnp.bfloat16).T,
                      preferred_element_type=jnp.float32)
        x_inv = jax.lax.rsqrt(jnp.maximum(jnp.sum(x * x, axis=1, keepdims=True), 1e-24))
        w_inv = jax.lax.rsqrt(jnp.maximum(jnp.sum(w * w, axis=1), 1e-24))[None, :]
        cos = raw * x_inv * w_inv
        sin = jnp.sqrt(jnp.clip(1.0 - cos ** 2, 1e-9, 1.0))
        phi = cos * math.cos(m) - sin * math.sin(m)
        if label is not None:
            one_hot = jax.nn.one_hot(label, w.shape[0], dtype=cos.dtype)
            cos = jnp.where(one_hot == 1, phi, cos)
        return cos * s

    expected = ref_matched(x, weight, label, s_, m_)
    assert jnp.allclose(out, expected, atol=2e-2, rtol=1e-3)

    # Full-f32 PyTorch-equivalent reference (loose bound: bf16 MXU inputs).
    def ref_f32(x, w, label, s, m):
        xn = x / jnp.maximum(jnp.linalg.norm(x, axis=1, keepdims=True), 1e-12)
        wn = w / jnp.maximum(jnp.linalg.norm(w, axis=1, keepdims=True), 1e-12)
        cos = xn @ wn.T
        sin = jnp.sqrt(jnp.clip(1.0 - cos ** 2, 1e-9, 1.0))
        phi = cos * math.cos(m) - sin * math.sin(m)
        if label is not None:
            one_hot = jax.nn.one_hot(label, w.shape[0], dtype=cos.dtype)
            cos = jnp.where(one_hot == 1, phi, cos)
        return cos * s

    assert float(jnp.max(jnp.abs(out - ref_f32(x, weight, label, s_, m_)))) < 1.0

    # No-label (inference) path: output = s * cosine, label operand/DMA elided.
    out_nl = jax.block_until_ready(
        arcface_forward(x, weight, None, s=s_, m=m_, tile_b=16, tile_c=128))
    assert jnp.allclose(out_nl, ref_matched(x, weight, None, s_, m_),
                        atol=2e-2, rtol=1e-3)

    print("KERNEL_OK")
</pallas_src>

<mosaic_0001>
module attributes {stable_mosaic.version = 11 : i64} {
  func.func @_arcface_kernel(%arg0: i32, %arg1: i32, %arg2: memref<16x64xbf16, #tpu.memory_space<vmem>>, %arg3: memref<128x64xbf16, #tpu.memory_space<vmem>>, %arg4: memref<16x1xf32, #tpu.memory_space<vmem>>, %arg5: memref<1x128xf32, #tpu.memory_space<vmem>>, %arg6: memref<16x1xi32, #tpu.memory_space<vmem>>, %arg7: memref<16x128xf32, #tpu.memory_space<vmem>>) attributes {dimension_semantics = [#tpu.dimension_semantics<parallel>, #tpu.dimension_semantics<parallel>], iteration_bounds = array<i64: 2, 2>, scalar_prefetch = 0 : i64, scratch_operands = 0 : i64, tpu.core_type = #tpu.core_type<tc>, window_params = [{transform_indices = @transform_0, window_bounds = array<i64: 16, 64>}, {transform_indices = @transform_1, window_bounds = array<i64: 128, 64>}, {transform_indices = @transform_2, window_bounds = array<i64: 16, 1>}, {transform_indices = @transform_3, window_bounds = array<i64: 1, 128>}, {transform_indices = @transform_4, window_bounds = array<i64: 16, 1>}, {transform_indices = @transform_5, window_bounds = array<i64: 16, 128>}]} {
    %c0 = arith.constant 0 : index
    %c0_0 = arith.constant 0 : index
    %0 = vector.load %arg2[%c0, %c0_0] : memref<16x64xbf16, #tpu.memory_space<vmem>>, vector<16x64xbf16>
    %c0_1 = arith.constant 0 : index
    %c0_2 = arith.constant 0 : index
    %1 = vector.load %arg3[%c0_1, %c0_2] : memref<128x64xbf16, #tpu.memory_space<vmem>>, vector<128x64xbf16>
    %cst = arith.constant dense<0.000000e+00> : vector<16x128xf32>
    %2 = tpu.matmul %0, %1, %cst {dimension_numbers = #tpu.dot_dimension_numbers<[1], [1], [0], [0], [0, 0, 1, 0], [], []>} : vector<16x64xbf16>, vector<128x64xbf16>, vector<16x128xf32> -> vector<16x128xf32>
    %c0_3 = arith.constant 0 : index
    %c0_4 = arith.constant 0 : index
    %3 = vector.load %arg4[%c0_3, %c0_4] : memref<16x1xf32, #tpu.memory_space<vmem>>, vector<16x1xf32>
    %4 = vector.broadcast %3 : vector<16x1xf32> to vector<16x128xf32>
    %5 = arith.mulf %2, %4 : vector<16x128xf32>
    %c0_5 = arith.constant 0 : index
    %c0_6 = arith.constant 0 : index
    %6 = vector.load %arg5[%c0_5, %c0_6] : memref<1x128xf32, #tpu.memory_space<vmem>>, vector<1x128xf32>
    %7 = vector.broadcast %6 : vector<1x128xf32> to vector<16x128xf32>
    %8 = arith.mulf %5, %7 : vector<16x128xf32>
    %c0_7 = arith.constant 0 : index
    %c0_8 = arith.constant 0 : index
    %9 = vector.load %arg6[%c0_7, %c0_8] : memref<16x1xi32, #tpu.memory_space<vmem>>, vector<16x1xi32>
    %c128_i32 = arith.constant 128 : i32
    %10 = arith.muli %arg0, %c128_i32 : i32
    %11 = vector.broadcast %10 : i32 to vector<16x1xi32>
    %12 = arith.subi %9, %11 : vector<16x1xi32>
    %13 = tpu.iota {dimensions = array<i32: 1>} : vector<16x128xi32>
    %14 = vector.broadcast %12 : vector<16x1xi32> to vector<16x128xi32>
    %15 = arith.cmpi eq, %13, %14 : vector<16x128xi32>
    %cst_9 = arith.constant 0.000000e+00 : f32
    %16 = vector.broadcast %cst_9 : f32 to vector<16x128xf32>
    %17 = arith.select %15, %8, %16 : vector<16x128xi1>, vector<16x128xf32>
    %cst_10 = arith.constant dense<0.000000e+00> : vector<16xf32>
    %18 = vector.multi_reduction <add>, %17, %cst_10 [1] : vector<16x128xf32> to vector<16xf32>
    %19 = vector.shape_cast %18 : vector<16xf32> to vector<16x1xf32>
    %20 = arith.mulf %19, %19 : vector<16x1xf32>
    %cst_11 = arith.constant 1.000000e+00 : f32
    %21 = vector.broadcast %cst_11 : f32 to vector<16x1xf32>
    %22 = arith.subf %21, %20 : vector<16x1xf32>
    %cst_12 = arith.constant 9.99999971E-10 : f32
    %cst_13 = arith.constant 1.000000e+00 : f32
    %23 = vector.broadcast %cst_12 : f32 to vector<16x1xf32>
    %24 = arith.maximumf %23, %22 : vector<16x1xf32>
    %25 = vector.broadcast %cst_13 : f32 to vector<16x1xf32>
    %26 = arith.minimumf %25, %24 : vector<16x1xf32>
    %27 = math.sqrt %26 : vector<16x1xf32>
    %cst_14 = arith.constant 0.87758255 : f32
    %28 = vector.broadcast %cst_14 : f32 to vector<16x1xf32>
    %29 = arith.mulf %19, %28 : vector<16x1xf32>
    %cst_15 = arith.constant 0.47942555 : f32
    %30 = vector.broadcast %cst_15 : f32 to vector<16x1xf32>
    %31 = arith.mulf %27, %30 : vector<16x1xf32>
    %32 = arith.subf %29, %31 : vector<16x1xf32>
    %33 = arith.subf %32, %19 : vector<16x1xf32>
    %cst_16 = arith.constant 0.000000e+00 : f32
    %34 = vector.shape_cast %33 : vector<16x1xf32> to vector<16x1xf32>
    %35 = vector.broadcast %34 : vector<16x1xf32> to vector<16x128xf32>
    %36 = vector.broadcast %cst_16 : f32 to vector<16x128xf32>
    %37 = arith.select %15, %35, %36 : vector<16x128xi1>, vector<16x128xf32>
    %38 = arith.addf %8, %37 : vector<16x128xf32>
    %cst_17 = arith.constant 6.400000e+01 : f32
    %39 = vector.broadcast %cst_17 : f32 to vector<16x128xf32>
    %40 = arith.mulf %38, %39 : vector<16x128xf32>
    %c0_18 = arith.constant 0 : index
    %c0_19 = arith.constant 0 : index
    %41 = vector.load %arg7[%c0_18, %c0_19] : memref<16x128xf32, #tpu.memory_space<vmem>>, vector<16x128xf32>
    tpu.vector_store %arg7[%c0_18, %c0_19], %40 {strides = array<i32>} : memref<16x128xf32, #tpu.memory_space<vmem>>, vector<16x128xf32>,
    return
  }
  func.func @transform_0(%arg0: i32, %arg1: i32) -> (i32, i32) {
    %c0_i32 = arith.constant 0 : i32
    %c0_i32_0 = arith.constant 0 : i32
    return %arg1, %c0_i32 : i32, i32
  }
  func.func @transform_1(%arg0: i32, %arg1: i32) -> (i32, i32) {
    %c0_i32 = arith.constant 0 : i32
    %c0_i32_0 = arith.constant 0 : i32
    return %arg0, %c0_i32 : i32, i32
  }
  func.func @transform_2(%arg0: i32, %arg1: i32) -> (i32, i32) {
    %c0_i32 = arith.constant 0 : i32
    %c0_i32_0 = arith.constant 0 : i32
    return %arg1, %c0_i32 : i32, i32
  }
  func.func @transform_3(%arg0: i32, %arg1: i32) -> (i32, i32) {
    %c0_i32 = arith.constant 0 : i32
    %c0_i32_0 = arith.constant 0 : i32
    return %c0_i32, %arg0 : i32, i32
  }
  func.func @transform_4(%arg0: i32, %arg1: i32) -> (i32, i32) {
    %c0_i32 = arith.constant 0 : i32
    %c0_i32_0 = arith.constant 0 : i32
    return %arg1, %c0_i32 : i32, i32
  }
  func.func @transform_5(%arg0: i32, %arg1: i32) -> (i32, i32) {
    %c0_i32 = arith.constant 0 : i32
    return %arg1, %arg0 : i32, i32
  }
}

</mosaic_0001>

<llo_original>
// kernel: tpu_custom_call.1
$region0: #{tpu_custom_call.1}
  #allocation0 [shape = 'u32[]', space=smem, size = 0x4, offset = 0x4, fixed_abs, tag = 'smem constant byte address 0x4 - core index']
  #allocation1 [shape = 'u32[144,128]{1,0:T(1,128)}', space=vmem, size = 0x12000, scoped, tag = 'internal scratch']
  %s0 = inlined_call_operand.vmem [shape: bf16[32,64], index: 0, kind: input, shape index: {}]
  %s1 = inlined_call_operand.vmem [shape: bf16[256,64], index: 1, kind: input, shape index: {}]
  %s2 = inlined_call_operand.vmem [shape: f32[32,1], index: 2, kind: input, shape index: {}]
  %s3 = inlined_call_operand.vmem [shape: f32[1,256], index: 3, kind: input, shape index: {}]
  %s4 = inlined_call_operand.vmem [shape: s32[32,1], index: 4, kind: input, shape index: {}]
  %s5 = inlined_call_operand.hbm [shape: f32[32,256], index: 5, kind: output, shape index: {}]
  %s6 = sld [smem:[#allocation0]]
  $region53: #{tpu_custom_call.1} parent=0
    _
  %s8 = ssub.s32 1, %s6
  %s9 = scalar_select 0, %s8, %s6
  $region1: #{tpu_custom_call.1} parent=0
    #allocation2 [shape = 'u8[16384]{0}', space=vmem, size = 0x4000, scoped, tag = 'output window, operand 0']
    #allocation3 [shape = 's32[2]{0}', space=sflag, size = 0x8, scoped, tag = 'scoped memory for tpu_custom_call.1']
    %10 = vsyncpa [#allocation3], 0
    %s11 = scalar_lea.sflag [#allocation3], 1
    %12 = vsyncpa %s11, 0
    loop: start=0, step=1, limit=6
    $region2: #{tpu_custom_call.1} parent=1 // loop_pre_header
      _
    $region3: #{tpu_custom_call.1} parent=1 // loop_header
      %s14 = sphi 0, %s18
      %p15 = scmp.ge.s32.totalorder %s14, 6
      %s21 = sphi 0, %s33
      %s22 = sphi 0, %s29
      %s23 = sphi 0, %s21
      %s24 = sphi 0, %s22
      %s25 = sphi 0, %s23
      %s26 = sphi 0, %s24
      %s36 = sphi 0, %s38
      %s39 = sphi 0, %s36
      %s40 = sphi 0, %s39
      %s56 = sphi 0, %s40
      %s62 = sphi 0, %s64
      %s65 = sphi 0, %s62
      %s66 = sphi 0, %s65
      %s82 = sphi 0, %s66
      %s88 = sphi 0, %s90
      %s91 = sphi 0, %s88
      %s92 = sphi 0, %s91
      %s108 = sphi 0, %s92
      %s114 = sphi 0, %s116
      %s117 = sphi 0, %s114
      %s118 = sphi 0, %s117
      %s134 = sphi 0, %s118
      %s140 = sphi 0, %s142
      %s143 = sphi 0, %s140
      %s144 = sphi 0, %s143
      %s160 = sphi 0, %s144
      %s168 = sphi 0, %s170
      %s171 = sphi 0, %s168
      %s172 = sphi 0, %s171
      %s188 = sphi 0, %s172
    $region4: #{tpu_custom_call.1} parent=1 // loop_header_branch
      %17 = sbr.rel (%p15) target = $region8
    $region5: #{tpu_custom_call.1} parent=1 // loop_body
      %s19 = ssub.s32 %s14, 1
      %s20 = ssub.s32 %s14, 2
      %s27 = sadd.s32 1, %s22
      %p28 = scmp.ge.s32.totalorder %s27, 2
      %s29 = scalar_select %p28, 0, %s27
      %s30 = sadd.s32 1, %s21
      %s31 = scalar_select %p28, %s30, %s21
      %p32 = scmp.ge.s32.totalorder %s31, 2
      %s33 = scalar_select %p32, 0, %s31
      %s34 = ssub.s32 %s22, %s29
      %p35 = scmp.eq.s32.totalorder %s34, 0
      %s37 = sadd.s32 %s36, 1
      %s38 = scalar_select %p35, %s36, %s37
      %p41 = pneg %p35
      %p42 = scmp.eq.s32.totalorder %s14, 3
      %p43 = por %p41, %p42
      %p44 = scmp.ne.s32.totalorder %s36, %s39
      %p45 = scmp.eq.s32.totalorder %s14, 0
      %p46 = por %p44, %p45
      %p47 = scmp.ne.s32.totalorder %s36, %s39
      %p48 = scmp.eq.s32.totalorder %s19, 3
      %p49 = por %p47, %p48
      %p50 = scmp.ne.s32.totalorder %s39, %s40
      %p51 = scmp.eq.s32.totalorder %s19, 0
      %p52 = por %p50, %p51
      %p53 = scmp.ne.s32.totalorder %s39, %s40
      %p54 = scmp.eq.s32.totalorder %s20, 3
      %p55 = por %p53, %p54
      %p57 = scmp.ne.s32.totalorder %s40, %s56
      %p58 = scmp.eq.s32.totalorder %s20, 0
      %p59 = por %p57, %p58
      %s60 = ssub.s32 %s21, %s33
      %p61 = scmp.eq.s32.totalorder %s60, 0
      %s63 = sadd.s32 %s62, 1
      %s64 = scalar_select %p61, %s62, %s63
      %p67 = pneg %p61
      %p68 = scmp.eq.s32.totalorder %s14, 3
      %p69 = por %p67, %p68
      %p70 = scmp.ne.s32.totalorder %s62, %s65
      %p71 = scmp.eq.s32.totalorder %s14, 0
      %p72 = por %p70, %p71
      %p73 = scmp.ne.s32.totalorder %s62, %s65
      %p74 = scmp.eq.s32.totalorder %s19, 3
      %p75 = por %p73, %p74
      %p76 = scmp.ne.s32.totalorder %s65, %s66
      %p77 = scmp.eq.s32.totalorder %s19, 0
      %p78 = por %p76, %p77
      %p79 = scmp.ne.s32.totalorder %s65, %s66
      %p80 = scmp.eq.s32.totalorder %s20, 3
      %p81 = por %p79, %p80
      %p83 = scmp.ne.s32.totalorder %s66, %s82
      %p84 = scmp.eq.s32.totalorder %s20, 0
      %p85 = por %p83, %p84
      %s86 = ssub.s32 %s22, %s29
      %p87 = scmp.eq.s32.totalorder %s86, 0
      %s89 = sadd.s32 %s88, 1
      %s90 = scalar_select %p87, %s88, %s89
      %p93 = pneg %p87
      %p94 = scmp.eq.s32.totalorder %s14, 3
      %p95 = por %p93, %p94
      %p96 = scmp.ne.s32.totalorder %s88, %s91
      %p97 = scmp.eq.s32.totalorder %s14, 0
      %p98 = por %p96, %p97
      %p99 = scmp.ne.s32.totalorder %s88, %s91
      %p100 = scmp.eq.s32.totalorder %s19, 3
      %p101 = por %p99, %p100
      %p102 = scmp.ne.s32.totalorder %s91, %s92
      %p103 = scmp.eq.s32.totalorder %s19, 0
      %p104 = por %p102, %p103
      %p105 = scmp.ne.s32.totalorder %s91, %s92
      %p106 = scmp.eq.s32.totalorder %s20, 3
      %p107 = por %p105, %p106
      %p109 = scmp.ne.s32.totalorder %s92, %s108
      %p110 = scmp.eq.s32.totalorder %s20, 0
      %p111 = por %p109, %p110
      %s112 = ssub.s32 %s21, %s33
      %p113 = scmp.eq.s32.totalorder %s112, 0
      %s115 = sadd.s32 %s114, 1
      %s116 = scalar_select %p113, %s114, %s115
      %p119 = pneg %p113
      %p120 = scmp.eq.s32.totalorder %s14, 3
      %p121 = por %p119, %p120
      %p122 = scmp.ne.s32.totalorder %s114, %s117
      %p123 = scmp.eq.s32.totalorder %s14, 0
      %p124 = por %p122, %p123
      %p125 = scmp.ne.s32.totalorder %s114, %s117
      %p126 = scmp.eq.s32.totalorder %s19, 3
      %p127 = por %p125, %p126
      %p128 = scmp.ne.s32.totalorder %s117, %s118
      %p129 = scmp.eq.s32.totalorder %s19, 0
      %p130 = por %p128, %p129
      %p131 = scmp.ne.s32.totalorder %s117, %s118
      %p132 = scmp.eq.s32.totalorder %s20, 3
      %p133 = por %p131, %p132
      %p135 = scmp.ne.s32.totalorder %s118, %s134
      %p136 = scmp.eq.s32.totalorder %s20, 0
      %p137 = por %p135, %p136
      %s138 = ssub.s32 %s22, %s29
      %p139 = scmp.eq.s32.totalorder %s138, 0
      %s141 = sadd.s32 %s140, 1
      %s142 = scalar_select %p139, %s140, %s141
      %p145 = pneg %p139
      %p146 = scmp.eq.s32.totalorder %s14, 3
      %p147 = por %p145, %p146
      %p148 = scmp.ne.s32.totalorder %s140, %s143
      %p149 = scmp.eq.s32.totalorder %s14, 0
      %p150 = por %p148, %p149
      %p151 = scmp.ne.s32.totalorder %s140, %s143
      %p152 = scmp.eq.s32.totalorder %s19, 3
      %p153 = por %p151, %p152
      %p154 = scmp.ne.s32.totalorder %s143, %s144
      %p155 = scmp.eq.s32.totalorder %s19, 0
      %p156 = por %p154, %p155
      %p157 = scmp.ne.s32.totalorder %s143, %s144
      %p158 = scmp.eq.s32.totalorder %s20, 3
      %p159 = por %p157, %p158
      %p161 = scmp.ne.s32.totalorder %s144, %s160
      %p162 = scmp.eq.s32.totalorder %s20, 0
      %p163 = por %p161, %p162
      %s164 = ssub.s32 %s22, %s29
      %s165 = ssub.s32 %s21, %s33
      %s166 = sor.u32 %s164, %s165
      %p167 = scmp.eq.s32.totalorder %s166, 0
      %s169 = sadd.s32 %s168, 1
      %s170 = scalar_select %p167, %s168, %s169
      %p173 = pneg %p167
      %p174 = scmp.eq.s32.totalorder %s14, 3
      %p175 = por %p173, %p174
      %p176 = scmp.ne.s32.totalorder %s168, %s171
      %p177 = scmp.eq.s32.totalorder %s14, 0
      %p178 = por %p176, %p177
      %p179 = scmp.ne.s32.totalorder %s168, %s171
      %p180 = scmp.eq.s32.totalorder %s19, 3
      %p181 = por %p179, %p180
      %p182 = scmp.ne.s32.totalorder %s171, %s172
      %p183 = scmp.eq.s32.totalorder %s19, 0
      %p184 = por %p182, %p183
      %p185 = scmp.ne.s32.totalorder %s171, %s172
      %p186 = scmp.eq.s32.totalorder %s20, 3
      %p187 = por %p185, %p186
      %p189 = scmp.ne.s32.totalorder %s172, %s188
      %p190 = scmp.eq.s32.totalorder %s20, 0
      %p191 = por %p189, %p190
      %p192 = scmp.le.s32.totalorder 1, %s14
      %p193 = scmp.lt.s32.totalorder %s14, 5
      %p194 = pnand %p192, %p193
      %p195 = pneg %p194
      // Predicated region
      $region9: #{tpu_custom_call.1} parent=5 // pred_check
        _
      $region10: #{tpu_custom_call.1} parent=5 // pred_check_branch
        %197 = sbr.rel (%p194) target = $region12
      $region11: #{tpu_custom_call.1} parent=5 // pred_region
        %s198 = ssub.s32 %s14, 1
      $region12: #{tpu_custom_call.1} parent=5 // pred_fallthru
        _
      %p199 = scmp.lt.s32.totalorder %s14, 4
      // Predicated region
      $region13: #{tpu_custom_call.1} parent=5 // pred_check
        %p200 = pneg %p199
      $region14: #{tpu_custom_call.1} parent=5 // pred_check_branch
        %202 = sbr.rel (%p200) target = $region16
      $region15: #{tpu_custom_call.1} parent=5 // pred_region
        // Predicated region
        $region17: #{tpu_custom_call.1} parent=15 // pred_check
          %p203 = pneg %p46
        $region18: #{tpu_custom_call.1} parent=15 // pred_check_branch
          %205 = sbr.rel (%p203) target = $region20
        $region19: #{tpu_custom_call.1} parent=15 // pred_region
          %s206 = smul.u32 2, %s22
          %p207 = scmp.lt.s32.totalorder %s206, 3
          %s208 = scalar_select %p207, %s206, 3
          %s209 = smul.addr %s208, 4
          %s210 = scalar_lea.vmem %s0, %s209
          %s211 = smul.u32 2, %s22
        $region20: #{tpu_custom_call.1} parent=15 // pred_fallthru
          _
        // Predicated region
        $region21: #{tpu_custom_call.1} parent=15 // pred_check
          %p212 = pneg %p72
        $region22: #{tpu_custom_call.1} parent=15 // pred_check_branch
          %214 = sbr.rel (%p212) target = $region24
        $region23: #{tpu_custom_call.1} parent=15 // pred_region
          %s215 = smul.u32 16, %s21
          %p216 = scmp.lt.s32.totalorder %s215, 31
          %s217 = scalar_select %p216, %s215, 31
          %s218 = smul.addr %s217, 4
          %s219 = scalar_lea.vmem %s1, %s218
          %s220 = smul.u32 16, %s21
        $region24: #{tpu_custom_call.1} parent=15 // pred_fallthru
          _
        // Predicated region
        $region25: #{tpu_custom_call.1} parent=15 // pred_check
          %p221 = pneg %p98
        $region26: #{tpu_custom_call.1} parent=15 // pred_check_branch
          %223 = sbr.rel (%p221) target = $region28
        $region27: #{tpu_custom_call.1} parent=15 // pred_region
          %s224 = smul.u32 2, %s22
          %p225 = scmp.lt.s32.totalorder %s224, 3
          %s226 = scalar_select %p225, %s224, 3
          %s227 = smul.addr %s226, 8
          %s228 = scalar_lea.vmem %s2, %s227
          %s229 = smul.u32 2, %s22
        $region28: #{tpu_custom_call.1} parent=15 // pred_fallthru
          _
        // Predicated region
        $region29: #{tpu_custom_call.1} parent=15 // pred_check
          %p230 = pneg %p124
        $region30: #{tpu_custom_call.1} parent=15 // pred_check_branch
          %232 = sbr.rel (%p230) target = $region32
        $region31: #{tpu_custom_call.1} parent=15 // pred_region
          %p233 = scmp.lt.s32.totalorder %s21, 1
          %s234 = scalar_select %p233, %s21, 1
          %s235 = scalar_lea.vmem %s3, %s234
        $region32: #{tpu_custom_call.1} parent=15 // pred_fallthru
          _
        // Predicated region
        $region33: #{tpu_custom_call.1} parent=15 // pred_check
          %p236 = pneg %p150
        $region34: #{tpu_custom_call.1} parent=15 // pred_check_branch
          %238 = sbr.rel (%p236) target = $region36
        $region35: #{tpu_custom_call.1} parent=15 // pred_region
          %s239 = smul.u32 2, %s22
          %p240 = scmp.lt.s32.totalorder %s239, 3
          %s241 = scalar_select %p240, %s239, 3
          %s242 = smul.addr %s241, 8
          %s243 = scalar_lea.vmem %s4, %s242
          %s244 = smul.u32 2, %s22
        $region36: #{tpu_custom_call.1} parent=15 // pred_fallthru
          _
      $region16: #{tpu_custom_call.1} parent=5 // pred_fallthru
        _
      %p245 = scmp.le.s32.totalorder 1, %s14
      %p246 = scmp.lt.s32.totalorder %s14, 5
      %p247 = pnand %p245, %p246
      %p248 = pneg %p247
      // Predicated region
      $region37: #{tpu_custom_call.1} parent=5 // pred_check
        _
      $region38: #{tpu_custom_call.1} parent=5 // pred_check_branch
        %250 = sbr.rel (%p247) target = $region40
      $region39: #{tpu_custom_call.1} parent=5 // pred_region
        %s251 = ssub.s32 %s14, 1
        %s252 = smul.u32 2, %s24
        %p253 = scmp.lt.s32.totalorder %s252, 3
        %s254 = scalar_select %p253, %s252, 3
        %s255 = smul.addr %s254, 4
        %s256 = scalar_lea.vmem %s0, %s255
        %p257 = pneg %p52
        %p258 = pneg %p49
        %s259 = smul.u32 16, %s23
        %p260 = scmp.lt.s32.totalorder %s259, 31
        %s261 = scalar_select %p260, %s259, 31
        %s262 = smul.addr %s261, 4
        %s263 = scalar_lea.vmem %s1, %s262
        %p264 = pneg %p78
        %p265 = pneg %p75
        %s266 = smul.u32 2, %s24
        %p267 = scmp.lt.s32.totalorder %s266, 3
        %s268 = scalar_select %p267, %s266, 3
        %s269 = smul.addr %s268, 8
        %s270 = scalar_lea.vmem %s2, %s269
        %p271 = pneg %p104
        %p272 = pneg %p101
        %p273 = scmp.lt.s32.totalorder %s23, 1
        %s274 = scalar_select %p273, %s23, 1
        %s275 = scalar_lea.vmem %s3, %s274
        %p276 = pneg %p130
        %p277 = pneg %p127
        %s278 = smul.u32 2, %s24
        %p279 = scmp.lt.s32.totalorder %s278, 3
        %s280 = scalar_select %p279, %s278, 3
        %s281 = smul.addr %s280, 8
        %s282 = scalar_lea.vmem %s4, %s281
        %p283 = pneg %p156
        %p284 = pneg %p153
        %p285 = pneg %p184
        %p286 = pneg %p181
        %s287 = sand.u32 %s171, 1
        %s288 = scalar_lea.sflag [#allocation3], %s287
        %s289 = sand.u32 %s171, 1
        %s290 = smul.addr %s289, 16
        %s291 = scalar_lea.vmem [#allocation2], %s290
        %s292 = smul.u32 2, %s24
        %p293 = scmp.lt.s32.totalorder %s292, 3
        %s294 = scalar_select %p293, %s292, 3
        %s295 = smul.addr %s294, 4
        %s296 = scalar_lea.vmem %s0, %s295
        %s297 = smul.u32 2, %s24
        %s298 = smul.u32 16, %s23
        %p299 = scmp.lt.s32.totalorder %s298, 31
        %s300 = scalar_select %p299, %s298, 31
        %s301 = smul.addr %s300, 4
        %s302 = scalar_lea.vmem %s1, %s301
        %s303 = smul.u32 16, %s23
        %s304 = smul.u32 2, %s24
        %p305 = scmp.lt.s32.totalorder %s304, 3
        %s306 = scalar_select %p305, %s304, 3
        %s307 = smul.addr %s306, 8
        %s308 = scalar_lea.vmem %s2, %s307
        %s309 = smul.u32 2, %s24
        %p310 = scmp.lt.s32.totalorder %s23, 1
        %s311 = scalar_select %p310, %s23, 1
        %s312 = scalar_lea.vmem %s3, %s311
        %s313 = smul.u32 2, %s24
        %p314 = scmp.lt.s32.totalorder %s313, 3
        %s315 = scalar_select %p314, %s313, 3
        %s316 = smul.addr %s315, 8
        %s317 = scalar_lea.vmem %s4, %s316
        %s318 = smul.u32 2, %s24
        %s319 = smul.u32 2, %s24
        %v321 = vld [vmem:[%s296] sm:$0xf]
        %v322 = vld [vmem:[%s296 + $0x4] sm:$0xf]
        %v323 = vld [vmem:[%s302] sm:$0xf]
        %v324 = vld [vmem:[%s302 + $0x4] sm:$0xf]
        %v325 = vld [vmem:[%s302 + $0x8] sm:$0xf]
        %v326 = vld [vmem:[%s302 + $0xc] sm:$0xf]
        %v327 = vld [vmem:[%s302 + $0x10] sm:$0xf]
        %v328 = vld [vmem:[%s302 + $0x14] sm:$0xf]
        %v329 = vld [vmem:[%s302 + $0x18] sm:$0xf]
        %v330 = vld [vmem:[%s302 + $0x1c] sm:$0xf]
        %v331 = vld [vmem:[%s302 + $0x20] sm:$0xf]
        %v332 = vld [vmem:[%s302 + $0x24] sm:$0xf]
        %v333 = vld [vmem:[%s302 + $0x28] sm:$0xf]
        %v334 = vld [vmem:[%s302 + $0x2c] sm:$0xf]
        %v335 = vld [vmem:[%s302 + $0x30] sm:$0xf]
        %v336 = vld [vmem:[%s302 + $0x34] sm:$0xf]
        %v337 = vld [vmem:[%s302 + $0x38] sm:$0xf]
        %v338 = vld [vmem:[%s302 + $0x3c] sm:$0xf]
        %v341 = vunpack.c.l.b16 %v321
        %v342 = vunpack.c.l.b16 %v322
        %v343 = vpack.c.b16 %v342, %v341
        %v360 = vunpack.c.l.b16 %v323
        %v361 = vunpack.c.l.b16 %v324
        %v362 = vunpack.c.l.b16 %v325
        %v363 = vunpack.c.l.b16 %v326
        %v364 = vunpack.c.l.b16 %v327
        %v365 = vunpack.c.l.b16 %v328
        %v366 = vunpack.c.l.b16 %v329
        %v367 = vunpack.c.l.b16 %v330
        %v368 = vunpack.c.l.b16 %v331
        %v369 = vunpack.c.l.b16 %v332
        %v370 = vunpack.c.l.b16 %v333
        %v371 = vunpack.c.l.b16 %v334
        %v372 = vunpack.c.l.b16 %v335
        %v373 = vunpack.c.l.b16 %v336
        %v374 = vunpack.c.l.b16 %v337
        %v375 = vunpack.c.l.b16 %v338
        %v376 = vpack.c.b16 %v361, %v360
        %v377 = vpack.c.b16 %v363, %v362
        %v378 = vpack.c.b16 %v365, %v364
        %v379 = vpack.c.b16 %v367, %v366
        %v380 = vpack.c.b16 %v369, %v368
        %v381 = vpack.c.b16 %v371, %v370
        %v382 = vpack.c.b16 %v373, %v372
        %v383 = vpack.c.b16 %v375, %v374
        %vm384 = vcmask 523264
        %v386 = vsel %vm384, %v343, 0
        %v389 = vsel %vm384, %v376, 0
        %v392 = vsel %vm384, %v377, 0
        %v395 = vsel %vm384, %v378, 0
        %v398 = vsel %vm384, %v379, 0
        %v401 = vsel %vm384, %v380, 0
        %v404 = vsel %vm384, %v381, 0
        %v407 = vsel %vm384, %v382, 0
        %v410 = vsel %vm384, %v383, 0
        %412 = vmatprep.subr.bf16.mxu0 0
        %413 = vmatpush1.bf16.xpose.msra.mxu0 %v389
        %414 = vmatprep.subr.bf16.mxu0 0
        %415 = vmatpush1.bf16.xpose.msra.mxu0 %v392
        %416 = vmatprep.subr.bf16.mxu0 0
        %417 = vmatpush1.bf16.xpose.msra.mxu0 %v395
        %418 = vmatprep.subr.bf16.mxu0 0
        %419 = vmatpush1.bf16.xpose.msra.mxu0 %v398
        %420 = vmatprep.subr.bf16.mxu0 0
        %421 = vmatpush1.bf16.xpose.msra.mxu0 %v401
        %422 = vmatprep.subr.bf16.mxu0 0
        %423 = vmatpush1.bf16.xpose.msra.mxu0 %v404
        %424 = vmatprep.subr.bf16.mxu0 0
        %425 = vmatpush1.bf16.xpose.msra.mxu0 %v407
        %426 = vmatprep.subr.bf16.mxu0 0
        %427 = vmatpush1.bf16.xpose.msra.mxu0 %v410
        %428 = vmatprep.subr.bf16.mxu0 0
        %429 = vmatpush1.bf16.xpose.msra.mxu0 0
        %430 = vmatprep.subr.bf16.mxu0 0
        %431 = vmatpush1.bf16.xpose.msra.mxu0 0
        %432 = vmatprep.subr.bf16.mxu0 0
        %433 = vmatpush1.bf16.xpose.msra.mxu0 0
        %434 = vmatprep.subr.bf16.mxu0 0
        %435 = vmatpush1.bf16.xpose.msra.mxu0 0
        %436 = vmatprep.subr.bf16.mxu0 0
        %437 = vmatpush1.bf16.xpose.msra.mxu0 0
        %438 = vmatprep.subr.bf16.mxu0 0
        %439 = vmatpush1.bf16.xpose.msra.mxu0 0
        %440 = vmatprep.subr.bf16.mxu0 0
        %441 = vmatpush1.bf16.xpose.msra.mxu0 0
        %442 = vmatprep.subr.bf16.mxu0 0
        %443 = vmatpush1.bf16.xpose.msra.mxu0 0
        %444 = vmatprep.mubr.bf16.mxu0 0
        %445 = vmatmul.mubr.bf16.gmra.mrb[0].mxu0 %v386
        %v446 = vpop.f32.mrb[0].mxu0
        %v447 = vadd.f32 0.0, %v446
        %v448 = vpop.f32.mrb[0].mxu0
        %v449 = vpop.f32.mrb[0].mxu0
        %v450 = vadd.f32 0.0, %v449
        %v451 = vpop.f32.mrb[0].mxu0
        %452 = vdwg.mxu0
        %v453 = vld [vmem:[%s308] sm:$0xff]
        %v454 = vld [vmem:[%s308 + $0x8] sm:$0xff]
        %456 = vset.pattern.permute.xlu0 0
        %457 = vperm.xlu0 %456, %v453
        %v458 = vpop.permute.xlu0 %457
        %461 = vset.pattern.permute.xlu0 0
        %462 = vperm.xlu0 %461, %v454
        %v463 = vpop.permute.xlu0 %462
        %v465 = vmul.f32 %v447, %v458
        %v466 = vmul.f32 %v450, %v463
        %v467 = vld [vmem:[%s312] sm:$0x1]
        %v469 = vlaneseq
        %v470 = vshrl.u32 %v469, 7
        %v471 = vsub.s32 0, %v470
        %v472 = vrot.slane %v467, %v471
        %v474 = vmul.f32 %v465, %v472
        %v475 = vmul.f32 %v466, %v472
        %v476 = vld [vmem:[%s317] sm:$0xff]
        %v477 = vld [vmem:[%s317 + $0x8] sm:$0xff]
        %s478 = smul.u32 %s23, 128
        %v479 = vstv %s478
        %v480 = vsub.s32 %v476, %v479
        %v481 = vsub.s32 %v477, %v479
        %v482 = vlaneseq
        %v483 = vand.u32 %v482, 127
        %484 = vset.pattern.permute.xlu0 0
        %485 = vperm.xlu0 %484, %v480
        %v486 = vpop.permute.xlu0 %485
        %487 = vset.pattern.permute.xlu0 0
        %488 = vperm.xlu0 %487, %v481
        %v489 = vpop.permute.xlu0 %488
        %vm490 = vcmp.eq.s32.totalorder %v483, %v486
        %vm491 = vcmp.eq.s32.totalorder %v483, %v489
        %v492 = vsel %vm490, %v474, 0.0
        %v493 = vsel %vm491, %v475, 0.0
        %494 = vadd.xlane.f32.xlu0 %v492
        %v495 = vpop.xlane.xlu0 %494
        %496 = vadd.xlane.f32.xlu0 %v493
        %v497 = vpop.xlane.xlu0 %496
        %v498 = vmul.f32 %v495, %v495
        %v499 = vmul.f32 %v497, %v497
        %v500 = vsub.f32 1.0, %v498
        %v501 = vsub.f32 1.0, %v499
        %v502 = vmax.f32 %v500, 1e-09
        %v503 = vmax.f32 %v501, 1e-09
        %v504 = vmin.f32 %v502, 1.0
        %v505 = vmin.f32 %v503, 1.0
        %v506 = vrsqrt.pop %v504
        %v507 = vmul.f32 %v504, %v506
        %vm508 = vcmp.eq.f32.partialorder %v504, inf
        %v509 = vsel %vm508, %v504, %v507
        %vm510 = vcmp.eq.f32.partialorder %v504, 0.0
        %v511 = vand.u32 %v504, 2147483648
        %v512 = vsel %vm510, %v511, %v509
        %v513 = vrsqrt.pop %v505
        %v514 = vmul.f32 %v505, %v513
        %vm515 = vcmp.eq.f32.partialorder %v505, inf
        %v516 = vsel %vm515, %v505, %v514
        %vm517 = vcmp.eq.f32.partialorder %v505, 0.0
        %v518 = vand.u32 %v505, 2147483648
        %v519 = vsel %vm517, %v518, %v516
        %v520 = vmul.f32 %v495, 0.87758255
        %v521 = vmul.f32 %v497, 0.87758255
        %v522 = vmul.f32 %v512, 0.47942555
        %v523 = vmul.f32 %v519, 0.47942555
        %v524 = vsub.f32 %v520, %v522
        %v525 = vsub.f32 %v521, %v523
        %v526 = vsub.f32 %v524, %v495
        %v527 = vsub.f32 %v525, %v497
        %v528 = vsel %vm490, %v526, 0.0
        %v529 = vsel %vm491, %v527, 0.0
        %v530 = vadd.f32 %v474, %v528
        %v531 = vadd.f32 %v475, %v529
        %v532 = vmul.f32 %v530, 64.0
        %v533 = vmul.f32 %v531, 64.0
        %534 = vst [vmem:[%s291] sm:$0xff] %v532
        %535 = vst [vmem:[%s291 + $0x8] sm:$0xff] %v533
        %s536 = sand.u32 %s171, 1
        %s537 = scalar_lea.sflag [#allocation3], %s536
        %s538 = sand.u32 %s171, 1
        %s539 = smul.addr %s538, 16
        %s540 = scalar_lea.vmem [#allocation2], %s539
        // Predicated region
        $region41: #{tpu_custom_call.1} parent=39 // pred_check
          %p541 = pneg %p181
        $region42: #{tpu_custom_call.1} parent=39 // pred_check_branch
          %543 = sbr.rel (%p541) target = $region44
        $region43: #{tpu_custom_call.1} parent=39 // pred_region
          %s544 = smul.u32 2, %s24
          %s546 = ssub.s32 256, 256
          %547 = vsyncadd %s537, %s546
          %s548 = smul.addr %s544, 2
          %s549 = sadd.s32 %s23, %s548
          %s550 = smul.addr %s549, 128
          %s551 = scalar_lea.hbm %s5, %s550
          %s552 = sshll.u32 %s540, 4
          %s553 = int_to_ptr.vmem [resolvable:$true] %s552
          %558 = dma.vmem_to_hbm [thread:$0]  %s553, 256, %s551, %s537, 128, 256, 8
        $region44: #{tpu_custom_call.1} parent=39 // pred_fallthru
          _
      $region40: #{tpu_custom_call.1} parent=5 // pred_fallthru
        _
      %p559 = scmp.le.s32.totalorder 2, %s14
      // Predicated region
      $region45: #{tpu_custom_call.1} parent=5 // pred_check
        %p560 = pneg %p559
      $region46: #{tpu_custom_call.1} parent=5 // pred_check_branch
        %562 = sbr.rel (%p560) target = $region48
      $region47: #{tpu_custom_call.1} parent=5 // pred_region
        %s563 = ssub.s32 %s14, 2
        // Predicated region
        $region49: #{tpu_custom_call.1} parent=47 // pred_check
          %p564 = pneg %p187
        $region50: #{tpu_custom_call.1} parent=47 // pred_check_branch
          %566 = sbr.rel (%p564) target = $region52
        $region51: #{tpu_custom_call.1} parent=47 // pred_region
          %s567 = sand.u32 %s172, 1
          %s568 = scalar_lea.sflag [#allocation3], %s567
          %s569 = sand.u32 %s172, 1
          %s570 = smul.addr %s569, 16
          %s571 = scalar_lea.vmem [#allocation2], %s570
          %572 = dma.done %s568, 256
        $region52: #{tpu_custom_call.1} parent=47 // pred_fallthru
          _
      $region48: #{tpu_custom_call.1} parent=5 // pred_fallthru
        _
    $region6: #{tpu_custom_call.1} parent=1 // loop_footer
      %s18 = sadd.s32 1, %s14
    $region7: #{tpu_custom_call.1} parent=1 // loop_footer_branch
      %13 = sbr.rel target = $region3
    $region8: #{tpu_custom_call.1} parent=1 // loop_exit
      _
    %573 = vsyncpa [#allocation3], 1
    %s574 = scalar_lea.sflag [#allocation3], 1
    %575 = vsyncpa %s574, 1

</llo_original>
